<compile_context>
chip_gen: v5e
topology: v5e:2x2
jax: 0.10.0
libtpu: 0.0.40
codegen_flags: <defaults>
</compile_context>

<pallas_src>
import functools

import jax
import jax.numpy as jnp
from jax.experimental import pallas as pl
from jax.experimental.pallas import tpu as pltpu


# ---------------------------------------------------------------------------
# Kernel: one (seq-tile, batch) block of q and k.
#   cs_ref : (2, TS, D)  plane 0 = [cos, cos, 1..], plane 1 = [-sin, sin, 0..]
#   q_ref/qo_ref : (TS, Hq, D)    k_ref/ko_ref : (TS, Hk, D)
# ---------------------------------------------------------------------------
def _rope_kernel(cs_ref, q_ref, k_ref, qo_ref, ko_ref, *,
                 d2, ro_dim, full_rotary, roll_path):
    D = q_ref.shape[-1]

    if roll_path:
        # D is a multiple of 128: full-width lane-dense loads/stores.
        cos = cs_ref[0][:, None, :]       # (TS, 1, D) broadcast over heads
        sig = cs_ref[1][:, None, :]       # [-sin, sin, 0..]

        def apply(x_ref, o_ref):
            x = x_ref[...]
            if full_rotary:
                # roll(+d2) == roll(-d2) when ro_dim == D: one XLU roll.
                partner = pltpu.roll(x, shift=d2, axis=2)
            else:
                # Partial rotary: partner[i] = x[i + d2] for i <  d2,
                #                              x[i - d2] for d2 <= i < ro_dim;
                # lanes >= ro_dim multiply sin == 0, cos == 1 (pass-through).
                lane = jax.lax.broadcasted_iota(jnp.int32, x.shape, 2)
                partner = jnp.where(lane < d2,
                                    pltpu.roll(x, shift=D - d2, axis=2),
                                    pltpu.roll(x, shift=d2, axis=2))
            # Single full-width unmasked store.
            o_ref[...] = (x * cos + partner * sig).astype(o_ref.dtype)
    else:
        # Fallback (D not a multiple of 128): half-width slabs, slice stores.
        c = cs_ref[0][:, :d2][:, None, :]            # cos
        s = cs_ref[1][:, d2:2 * d2][:, None, :]      # +sin

        def apply(x_ref, o_ref):
            x1 = x_ref[:, :, :d2]
            x2 = x_ref[:, :, d2:2 * d2]
            o_ref[:, :, :d2] = (x1 * c - x2 * s).astype(o_ref.dtype)
            o_ref[:, :, d2:2 * d2] = (x2 * c + x1 * s).astype(o_ref.dtype)
            if ro_dim < D:
                o_ref[:, :, ro_dim:] = x_ref[:, :, ro_dim:].astype(o_ref.dtype)

    apply(q_ref, qo_ref)
    apply(k_ref, ko_ref)


# ---------------------------------------------------------------------------
# Tiling / VMEM helpers
# ---------------------------------------------------------------------------
def _round_up(x, m):
    return ((x + m - 1) // m) * m


def _vmem_capacity_bytes():
    try:
        info = pltpu.get_tpu_info()
        cap = getattr(info, "vmem_capacity_bytes", None)
        if cap:
            return int(cap)
    except Exception:
        pass
    return 64 * 1024 * 1024   # conservative (v7x per-TensorCore VMEM)


def _pick_seq_tile(S, bytes_per_row, budget_bytes, cap=None):
    """Budget-derived seq tile (multiple of 8, or the full seq extent)."""
    ts = max(8, budget_bytes // max(1, bytes_per_row))
    if cap is not None:
        ts = min(ts, max(1, cap))
    if ts >= S:
        return S                      # single block covering the full extent
    return max(8, (ts // 8) * 8)


def _build_rope_table(cos, sin, head_dim):
    """(2, S, head_dim) fused table: [cos,cos,1..] and [-sin,sin,0..]."""
    S, d2 = cos.shape
    ro_dim = 2 * d2
    pad = head_dim - ro_dim
    cos_parts = [cos, cos]
    sin_parts = [-sin, sin]
    if pad > 0:
        cos_parts.append(jnp.ones((S, pad), cos.dtype))
        sin_parts.append(jnp.zeros((S, pad), sin.dtype))
    cos_row = jnp.concatenate(cos_parts, axis=-1)
    sin_row = jnp.concatenate(sin_parts, axis=-1)
    return jnp.stack([cos_row, sin_row], axis=0)


# ---------------------------------------------------------------------------
# pallas_call wrapper
# ---------------------------------------------------------------------------
def _apply_rotary_table(q, k, table, ro_dim, *, max_seq_tile=None,
                        vmem_budget_bytes=None):
    """q: (B,S,Hq,D); k: (B,S,Hk,D); table: (2,S,D).

    Note: outputs alias q/k.  To actually avoid defensive copies, donate q/k at
    the jit boundary (jax.jit(..., donate_argnums=...)) or call from inside a
    jit where q/k are intermediates.
    """
    B, S, Hq, D = q.shape
    Bk, Sk, Hk, Dk = k.shape
    assert (Bk, Sk, Dk) == (B, S, D)
    assert table.shape == (2, S, D)
    assert 0 < ro_dim <= D and ro_dim % 2 == 0
    d2 = ro_dim // 2

    roll_path = (D % 128 == 0)
    full_rotary = (ro_dim == D)

    # --- Generation-aware tile budget (RoPE is purely HBM-bandwidth bound). ---
    vmem_cap = _vmem_capacity_bytes()
    if vmem_budget_bytes is None:
        # ~32 MiB on v7x (64 MiB/TC), ~48 MiB on v5e/v6e (128 MiB).
        vmem_budget_bytes = min(int(vmem_cap * 0.5), 48 * 1024 * 1024)

    itemsize = jnp.dtype(q.dtype).itemsize
    t_item = jnp.dtype(table.dtype).itemsize
    sub = 8 * max(1, 4 // itemsize)                  # sublane granularity
    Hqp, Hkp = _round_up(Hq, sub), _round_up(Hk, sub)
    Dp = _round_up(D, 128)
    # Per seq row resident in VMEM: q + k blocks, in + out, double-buffered,
    # plus the fused table (2 planes) double-buffered.
    bytes_per_row = (Hqp + Hkp) * Dp * itemsize * 2 * 2 + 2 * Dp * t_item * 2

    TS = _pick_seq_tile(S, bytes_per_row, vmem_budget_bytes, cap=max_seq_tile)
    n_seq = pl.cdiv(S, TS)

    working = TS * bytes_per_row
    vmem_limit = int(min(vmem_cap * 0.9,
                         max(working + (4 << 20), 32 * 1024 * 1024)))

    kernel = functools.partial(_rope_kernel, d2=d2, ro_dim=ro_dim,
                               full_rotary=full_rotary, roll_path=roll_path)

    # Batch dim squeezed (None); (H, D) equal the full array extents so the
    # (8,128) constraint holds for any H/D; TS (multiple of 8 or == S) tiles the
    # sequence with a masked ragged last block.
    q_spec = pl.BlockSpec((None, TS, Hq, D), lambda s, b: (b, s, 0, 0))
    k_spec = pl.BlockSpec((None, TS, Hk, D), lambda s, b: (b, s, 0, 0))
    # Table block index is independent of b: with grid (n_seq, B) the table is
    # DMA'd once per seq tile, not once per (batch, seq tile).
    cs_spec = pl.BlockSpec((2, TS, D), lambda s, b: (0, s, 0))

    return pl.pallas_call(
        kernel,
        out_shape=(
            jax.ShapeDtypeStruct(q.shape, q.dtype),
            jax.ShapeDtypeStruct(k.shape, k.dtype),
        ),
        grid_spec=pltpu.PrefetchScalarGridSpec(
            num_scalar_prefetch=0,
            grid=(n_seq, B),
            in_specs=[cs_spec, q_spec, k_spec],
            out_specs=[q_spec, k_spec],
        ),
        # q/k updated in place (requires donation at the jit boundary to skip
        # defensive copies).
        input_output_aliases={1: 0, 2: 1},
        compiler_params=pltpu.CompilerParams(
            dimension_semantics=("parallel", "parallel"),
            vmem_limit_bytes=vmem_limit),
    )(table, q, k)


def apply_rotary_pallas(q, k, cos, sin, interleaved=False, max_seq_tile=None,
                        vmem_budget_bytes=None):
    """Standalone entry: q (B,S,Hq,D), k (B,S,Hk,D), cos/sin (S, rotary_dim//2)."""
    assert not interleaved  # TODO(synk): interleaved RoPE layout not implemented
    ro_dim = 2 * cos.shape[-1]
    table = _build_rope_table(cos.astype(q.dtype), sin.astype(q.dtype), q.shape[-1])
    return _apply_rotary_table(q, k, table, ro_dim, max_seq_tile=max_seq_tile,
                               vmem_budget_bytes=vmem_budget_bytes)


# ---------------------------------------------------------------------------
# Module-level glue (cos/sin cache setup + cross-call table cache)
# ---------------------------------------------------------------------------
class RotaryEmbeddingPallas:
    def __init__(self, dim, base=10000.0, interleaved=False, scale_base=None,
                 scaling_factor=1.0, pos_idx_in_fp32=True, max_seq_tile=None,
                 vmem_budget_bytes=None):
        # The PyTorch forward asserts False when scale_base is not None.
        assert scale_base is None
        self.dim = dim
        self.base = float(base)
        self.interleaved = interleaved
        self.scaling_factor = scaling_factor
        self.pos_idx_in_fp32 = pos_idx_in_fp32
        self.max_seq_tile = max_seq_tile
        self.vmem_budget_bytes = vmem_budget_bytes
        self.inv_freq = 1.0 / (
            self.base ** (jnp.arange(0, dim, 2, dtype=jnp.float32) / dim)
        )
        self._table_cache = {}

    def _cos_sin(self, seqlen, dtype):
        if self.pos_idx_in_fp32:
            t = jnp.arange(seqlen, dtype=jnp.float32) / self.scaling_factor
            inv_freq = self.inv_freq.astype(jnp.float32)
        else:
            t = jnp.arange(seqlen, dtype=self.inv_freq.dtype) / self.scaling_factor
            inv_freq = self.inv_freq
        freqs = jnp.outer(t, inv_freq)          # (seqlen, dim // 2)
        # Matches the torch module: cos/sin cast to the activation dtype.
        return jnp.cos(freqs).astype(dtype), jnp.sin(freqs).astype(dtype)

    def _get_table(self, seqlen, head_dim, dtype):
        key = (int(seqlen), int(head_dim), jnp.dtype(dtype).name)
        tab = self._table_cache.get(key)
        if tab is not None:
            return tab
        cos, sin = self._cos_sin(seqlen, dtype)
        tab = _build_rope_table(cos, sin, head_dim)
        try:
            if not isinstance(tab, jax.core.Tracer):   # don't cache traced values
                self._table_cache[key] = tab
        except Exception:
            pass
        return tab

    def __call__(self, q, k):
        assert not self.interleaved  # TODO(synk): interleaved layout not implemented
        table = self._get_table(q.shape[1], q.shape[-1], q.dtype)
        return _apply_rotary_table(q, k, table, ro_dim=self.dim,
                                   max_seq_tile=self.max_seq_tile,
                                   vmem_budget_bytes=self.vmem_budget_bytes)


# ---------------------------------------------------------------------------
# Pure-JAX reference (mirrors apply_rotary_emb_torch) for verification
# ---------------------------------------------------------------------------
def _rotate_half_ref(x):
    x1, x2 = jnp.split(x, 2, axis=-1)
    return jnp.concatenate([-x2, x1], axis=-1)


def _apply_rotary_ref(x, cos, sin):
    ro_dim = cos.shape[-1] * 2
    c = jnp.concatenate([cos, cos], axis=-1)[:, None, :]   # (S, 1, ro_dim)
    s = jnp.concatenate([sin, sin], axis=-1)[:, None, :]
    rot = x[..., :ro_dim] * c + _rotate_half_ref(x[..., :ro_dim]) * s
    return jnp.concatenate([rot, x[..., ro_dim:]], axis=-1)


def _run_case(B, S, Hq, Hk, D, rotary_dim, max_seq_tile):
    key = jax.random.PRNGKey(0)
    kq, kk = jax.random.split(key)
    q = jax.random.normal(kq, (B, S, Hq, D), dtype=jnp.float32)
    k = jax.random.normal(kk, (B, S, Hk, D), dtype=jnp.float32)

    rope = RotaryEmbeddingPallas(dim=rotary_dim, base=10000.0,
                                 max_seq_tile=max_seq_tile)

    # Reference (pure-JAX mirror of the PyTorch semantics).
    cos, sin = rope._cos_sin(S, q.dtype)
    q_ref = _apply_rotary_ref(q, cos, sin)
    k_ref = _apply_rotary_ref(k, cos, sin)

    q_out, k_out = rope(q, k)
    q_out = jax.block_until_ready(q_out)
    k_out = jax.block_until_ready(k_out)

    assert q_out.shape == q.shape and k_out.shape == k.shape
    assert jnp.allclose(q_out, q_ref, atol=1e-5, rtol=1e-5)
    assert jnp.allclose(k_out, k_ref, atol=1e-5, rtol=1e-5)


if __name__ == "__main__":
    # Case 1: full rotary, headdim=128 (single-roll fast path), GQA-style k,
    # grid of (2 seq tiles x 2 batch).
    _run_case(B=2, S=16, Hq=4, Hk=2, D=128, rotary_dim=128, max_seq_tile=8)
    # Case 2: partial rotary with headdim % 128 == 0 (where(roll,roll) full-width
    # store path) AND a ragged last seq block (S=12, TS=8 -> cdiv grid masking).
    _run_case(B=1, S=12, Hq=2, Hk=2, D=128, rotary_dim=64, max_seq_tile=8)
    # Case 3: headdim not a multiple of 128 -> slice-load / slice-store fallback.
    _run_case(B=1, S=8, Hq=2, Hk=2, D=32, rotary_dim=16, max_seq_tile=None)
    print("KERNEL_OK")
</pallas_src>

<mosaic_0001>
module attributes {stable_mosaic.version = 11 : i64} {
  func.func @_rope_kernel(%arg0: i32, %arg1: i32, %arg2: memref<2x8x128xf32, #tpu.memory_space<vmem>>, %arg3: memref<1x8x4x128xf32, #tpu.memory_space<vmem>>, %arg4: memref<1x8x2x128xf32, #tpu.memory_space<vmem>>, %arg5: memref<1x8x4x128xf32, #tpu.memory_space<vmem>>, %arg6: memref<1x8x2x128xf32, #tpu.memory_space<vmem>>) attributes {dimension_semantics = [#tpu.dimension_semantics<parallel>, #tpu.dimension_semantics<parallel>], iteration_bounds = array<i64: 2, 2>, scalar_prefetch = 0 : i64, scratch_operands = 0 : i64, tpu.core_type = #tpu.core_type<tc>, window_params = [{transform_indices = @transform_0, window_bounds = array<i64: 2, 8, 128>}, {transform_indices = @transform_1, window_bounds = array<i64: 1, 8, 4, 128>}, {transform_indices = @transform_2, window_bounds = array<i64: 1, 8, 2, 128>}, {transform_indices = @transform_3, window_bounds = array<i64: 1, 8, 4, 128>}, {transform_indices = @transform_4, window_bounds = array<i64: 1, 8, 2, 128>}]} {
    %c0 = arith.constant 0 : index
    %c0_0 = arith.constant 0 : index
    %c0_1 = arith.constant 0 : index
    %0 = vector.load %arg2[%c0, %c0_0, %c0_1] : memref<2x8x128xf32, #tpu.memory_space<vmem>>, vector<1x8x128xf32>
    %1 = vector.shape_cast %0 : vector<1x8x128xf32> to vector<8x128xf32>
    %2 = vector.shape_cast %1 : vector<8x128xf32> to vector<8x1x128xf32>
    %c1 = arith.constant 1 : index
    %c0_2 = arith.constant 0 : index
    %c0_3 = arith.constant 0 : index
    %3 = vector.load %arg2[%c1, %c0_2, %c0_3] : memref<2x8x128xf32, #tpu.memory_space<vmem>>, vector<1x8x128xf32>
    %4 = vector.shape_cast %3 : vector<1x8x128xf32> to vector<8x128xf32>
    %5 = vector.shape_cast %4 : vector<8x128xf32> to vector<8x1x128xf32>
    %c0_4 = arith.constant 0 : index
    %c0_5 = arith.constant 0 : index
    %c0_6 = arith.constant 0 : index
    %c0_7 = arith.constant 0 : index
    %6 = vector.load %arg3[%c0_4, %c0_5, %c0_6, %c0_7] : memref<1x8x4x128xf32, #tpu.memory_space<vmem>>, vector<1x8x4x128xf32>
    %7 = vector.shape_cast %6 : vector<1x8x4x128xf32> to vector<8x4x128xf32>
    %c64_i32 = arith.constant 64 : i32
    %8 = tpu.dynamic_rotate %7 by %c64_i32 dim 2 : vector<8x4x128xf32>, i32 -> vector<8x4x128xf32>
    %9 = vector.broadcast %2 : vector<8x1x128xf32> to vector<8x4x128xf32>
    %10 = arith.mulf %7, %9 : vector<8x4x128xf32>
    %11 = vector.broadcast %5 : vector<8x1x128xf32> to vector<8x4x128xf32>
    %12 = arith.mulf %8, %11 : vector<8x4x128xf32>
    %13 = arith.addf %10, %12 : vector<8x4x128xf32>
    %c0_8 = arith.constant 0 : index
    %c0_9 = arith.constant 0 : index
    %c0_10 = arith.constant 0 : index
    %c0_11 = arith.constant 0 : index
    %14 = vector.load %arg5[%c0_8, %c0_9, %c0_10, %c0_11] : memref<1x8x4x128xf32, #tpu.memory_space<vmem>>, vector<1x8x4x128xf32>
    %15 = vector.shape_cast %14 : vector<1x8x4x128xf32> to vector<8x4x128xf32>
    %16 = vector.shape_cast %13 : vector<8x4x128xf32> to vector<1x8x4x128xf32>
    tpu.vector_store %arg5[%c0_8, %c0_9, %c0_10, %c0_11], %16 {strides = array<i32>} : memref<1x8x4x128xf32, #tpu.memory_space<vmem>>, vector<1x8x4x128xf32>,
    %c0_12 = arith.constant 0 : index
    %c0_13 = arith.constant 0 : index
    %c0_14 = arith.constant 0 : index
    %c0_15 = arith.constant 0 : index
    %17 = vector.load %arg4[%c0_12, %c0_13, %c0_14, %c0_15] : memref<1x8x2x128xf32, #tpu.memory_space<vmem>>, vector<1x8x2x128xf32>
    %18 = vector.shape_cast %17 : vector<1x8x2x128xf32> to vector<8x2x128xf32>
    %c64_i32_16 = arith.constant 64 : i32
    %19 = tpu.dynamic_rotate %18 by %c64_i32_16 dim 2 : vector<8x2x128xf32>, i32 -> vector<8x2x128xf32>
    %20 = vector.broadcast %2 : vector<8x1x128xf32> to vector<8x2x128xf32>
    %21 = arith.mulf %18, %20 : vector<8x2x128xf32>
    %22 = vector.broadcast %5 : vector<8x1x128xf32> to vector<8x2x128xf32>
    %23 = arith.mulf %19, %22 : vector<8x2x128xf32>
    %24 = arith.addf %21, %23 : vector<8x2x128xf32>
    %c0_17 = arith.constant 0 : index
    %c0_18 = arith.constant 0 : index
    %c0_19 = arith.constant 0 : index
    %c0_20 = arith.constant 0 : index
    %25 = vector.load %arg6[%c0_17, %c0_18, %c0_19, %c0_20] : memref<1x8x2x128xf32, #tpu.memory_space<vmem>>, vector<1x8x2x128xf32>
    %26 = vector.shape_cast %25 : vector<1x8x2x128xf32> to vector<8x2x128xf32>
    %27 = vector.shape_cast %24 : vector<8x2x128xf32> to vector<1x8x2x128xf32>
    tpu.vector_store %arg6[%c0_17, %c0_18, %c0_19, %c0_20], %27 {strides = array<i32>} : memref<1x8x2x128xf32, #tpu.memory_space<vmem>>, vector<1x8x2x128xf32>,
    return
  }
  func.func @transform_0(%arg0: i32, %arg1: i32) -> (i32, i32, i32) {
    %c0_i32 = arith.constant 0 : i32
    %c0_i32_0 = arith.constant 0 : i32
    %c0_i32_1 = arith.constant 0 : i32
    return %c0_i32, %arg0, %c0_i32_0 : i32, i32, i32
  }
  func.func @transform_1(%arg0: i32, %arg1: i32) -> (i32, i32, i32, i32) {
    %c0_i32 = arith.constant 0 : i32
    %c0_i32_0 = arith.constant 0 : i32
    %c0_i32_1 = arith.constant 0 : i32
    return %arg1, %arg0, %c0_i32, %c0_i32_0 : i32, i32, i32, i32
  }
  func.func @transform_2(%arg0: i32, %arg1: i32) -> (i32, i32, i32, i32) {
    %c0_i32 = arith.constant 0 : i32
    %c0_i32_0 = arith.constant 0 : i32
    %c0_i32_1 = arith.constant 0 : i32
    return %arg1, %arg0, %c0_i32, %c0_i32_0 : i32, i32, i32, i32
  }
  func.func @transform_3(%arg0: i32, %arg1: i32) -> (i32, i32, i32, i32) {
    %c0_i32 = arith.constant 0 : i32
    %c0_i32_0 = arith.constant 0 : i32
    %c0_i32_1 = arith.constant 0 : i32
    return %arg1, %arg0, %c0_i32, %c0_i32_0 : i32, i32, i32, i32
  }
  func.func @transform_4(%arg0: i32, %arg1: i32) -> (i32, i32, i32, i32) {
    %c0_i32 = arith.constant 0 : i32
    %c0_i32_0 = arith.constant 0 : i32
    %c0_i32_1 = arith.constant 0 : i32
    return %arg1, %arg0, %c0_i32, %c0_i32_0 : i32, i32, i32, i32
  }
}

</mosaic_0001>

<llo_original>
// kernel: tpu_custom_call.1
$region0: #{tpu_custom_call.1}
  #allocation0 [shape = 'u32[]', space=smem, size = 0x4, offset = 0x4, fixed_abs, tag = 'smem constant byte address 0x4 - core index']
  #allocation1 [shape = 'u32[72,128]{1,0:T(1,128)}', space=vmem, size = 0x9000, scoped, tag = 'internal scratch']
  %s0 = inlined_call_operand.vmem [shape: f32[2,16,128], index: 0, kind: input, shape index: {}]
  %s1 = inlined_call_operand.hbm [shape: f32[2,16,4,128], index: 1, kind: input, shape index: {}, may-alias: {1,3}]
  %s2 = inlined_call_operand.hbm [shape: f32[2,16,2,128], index: 2, kind: input, shape index: {}, may-alias: {2,4}]
  %s3 = inlined_call_operand.hbm [shape: f32[2,16,4,128], index: 3, kind: output, shape index: {0}, may-alias: {1,3}]
  %s4 = inlined_call_operand.hbm [shape: f32[2,16,2,128], index: 4, kind: output, shape index: {1}, may-alias: {2,4}]
  %5 = xla_tuple %s3, %s4
  %s6 = sld [smem:[#allocation0]]
  $region99: #{tpu_custom_call.1} parent=0
    _
  %s8 = ssub.s32 1, %s6
  %s9 = scalar_select 0, %s8, %s6
  $region1: #{tpu_custom_call.1} parent=0
    #allocation2 [shape = 'u8[16384]{0}', space=vmem, size = 0x4000, scoped, tag = 'input window, operand 0']
    #allocation3 [shape = 'u8[32768]{0}', space=vmem, size = 0x8000, scoped, tag = 'input window, operand 1']
    #allocation4 [shape = 's32[2]{0}', space=sflag, size = 0x8, scoped, tag = 'scoped memory for tpu_custom_call.1']
    #allocation5 [shape = 's32[2]{0}', space=sflag, size = 0x8, scoped, tag = 'scoped memory for tpu_custom_call.1']
    #allocation6 [shape = 'u8[16384]{0}', space=vmem, size = 0x4000, scoped, tag = 'input window, operand 2']
    #allocation7 [shape = 's32[2]{0}', space=sflag, size = 0x8, scoped, tag = 'scoped memory for tpu_custom_call.1']
    #allocation8 [shape = 'u8[32768]{0}', space=vmem, size = 0x8000, scoped, tag = 'output window, operand 0']
    #allocation9 [shape = 'u8[16384]{0}', space=vmem, size = 0x4000, scoped, tag = 'output window, operand 1']
    #allocation10 [shape = 's32[2]{0}', space=sflag, size = 0x8, scoped, tag = 'scoped memory for tpu_custom_call.1']
    %10 = vsyncpa [#allocation4], 0
    %s11 = scalar_lea.sflag [#allocation4], 1
    %12 = vsyncpa %s11, 0
    %13 = vsyncpa [#allocation7], 0
    %s14 = scalar_lea.sflag [#allocation7], 1
    %15 = vsyncpa %s14, 0
    %16 = vsyncpa [#allocation5], 0
    %s17 = scalar_lea.sflag [#allocation5], 1
    %18 = vsyncpa %s17, 0
    %19 = vsyncpa [#allocation10], 0
    %s20 = scalar_lea.sflag [#allocation10], 1
    %21 = vsyncpa %s20, 0
    loop: start=0, step=1, limit=6
    $region2: #{tpu_custom_call.1} parent=1 // loop_pre_header
      _
    $region3: #{tpu_custom_call.1} parent=1 // loop_header
      %s23 = sphi 0, %s27
      %p24 = scmp.ge.s32.totalorder %s23, 6
      %s30 = sphi 0, %s42
      %s31 = sphi 0, %s38
      %s32 = sphi 0, %s30
      %s33 = sphi 0, %s31
      %s34 = sphi 0, %s32
      %s35 = sphi 0, %s33
      %s45 = sphi 0, %s47
      %s48 = sphi 0, %s45
      %s49 = sphi 0, %s48
      %s65 = sphi 0, %s49
      %s73 = sphi 0, %s75
      %s76 = sphi 0, %s73
      %s77 = sphi 0, %s76
      %s93 = sphi 0, %s77
      %s101 = sphi 0, %s103
      %s104 = sphi 0, %s101
      %s105 = sphi 0, %s104
      %s121 = sphi 0, %s105
      %s129 = sphi 0, %s131
      %s132 = sphi 0, %s129
      %s133 = sphi 0, %s132
      %s149 = sphi 0, %s133
      %s157 = sphi 0, %s159
      %s160 = sphi 0, %s157
      %s161 = sphi 0, %s160
      %s177 = sphi 0, %s161
    $region4: #{tpu_custom_call.1} parent=1 // loop_header_branch
      %26 = sbr.rel (%p24) target = $region8
    $region5: #{tpu_custom_call.1} parent=1 // loop_body
      %s28 = ssub.s32 %s23, 1
      %s29 = ssub.s32 %s23, 2
      %s36 = sadd.s32 1, %s31
      %p37 = scmp.ge.s32.totalorder %s36, 2
      %s38 = scalar_select %p37, 0, %s36
      %s39 = sadd.s32 1, %s30
      %s40 = scalar_select %p37, %s39, %s30
      %p41 = scmp.ge.s32.totalorder %s40, 2
      %s42 = scalar_select %p41, 0, %s40
      %s43 = ssub.s32 %s30, %s42
      %p44 = scmp.eq.s32.totalorder %s43, 0
      %s46 = sadd.s32 %s45, 1
      %s47 = scalar_select %p44, %s45, %s46
      %p50 = pneg %p44
      %p51 = scmp.eq.s32.totalorder %s23, 3
      %p52 = por %p50, %p51
      %p53 = scmp.ne.s32.totalorder %s45, %s48
      %p54 = scmp.eq.s32.totalorder %s23, 0
      %p55 = por %p53, %p54
      %p56 = scmp.ne.s32.totalorder %s45, %s48
      %p57 = scmp.eq.s32.totalorder %s28, 3
      %p58 = por %p56, %p57
      %p59 = scmp.ne.s32.totalorder %s48, %s49
      %p60 = scmp.eq.s32.totalorder %s28, 0
      %p61 = por %p59, %p60
      %p62 = scmp.ne.s32.totalorder %s48, %s49
      %p63 = scmp.eq.s32.totalorder %s29, 3
      %p64 = por %p62, %p63
      %p66 = scmp.ne.s32.totalorder %s49, %s65
      %p67 = scmp.eq.s32.totalorder %s29, 0
      %p68 = por %p66, %p67
      %s69 = ssub.s32 %s31, %s38
      %s70 = ssub.s32 %s30, %s42
      %s71 = sor.u32 %s69, %s70
      %p72 = scmp.eq.s32.totalorder %s71, 0
      %s74 = sadd.s32 %s73, 1
      %s75 = scalar_select %p72, %s73, %s74
      %p78 = pneg %p72
      %p79 = scmp.eq.s32.totalorder %s23, 3
      %p80 = por %p78, %p79
      %p81 = scmp.ne.s32.totalorder %s73, %s76
      %p82 = scmp.eq.s32.totalorder %s23, 0
      %p83 = por %p81, %p82
      %p84 = scmp.ne.s32.totalorder %s73, %s76
      %p85 = scmp.eq.s32.totalorder %s28, 3
      %p86 = por %p84, %p85
      %p87 = scmp.ne.s32.totalorder %s76, %s77
      %p88 = scmp.eq.s32.totalorder %s28, 0
      %p89 = por %p87, %p88
      %p90 = scmp.ne.s32.totalorder %s76, %s77
      %p91 = scmp.eq.s32.totalorder %s29, 3
      %p92 = por %p90, %p91
      %p94 = scmp.ne.s32.totalorder %s77, %s93
      %p95 = scmp.eq.s32.totalorder %s29, 0
      %p96 = por %p94, %p95
      %s97 = ssub.s32 %s31, %s38
      %s98 = ssub.s32 %s30, %s42
      %s99 = sor.u32 %s97, %s98
      %p100 = scmp.eq.s32.totalorder %s99, 0
      %s102 = sadd.s32 %s101, 1
      %s103 = scalar_select %p100, %s101, %s102
      %p106 = pneg %p100
      %p107 = scmp.eq.s32.totalorder %s23, 3
      %p108 = por %p106, %p107
      %p109 = scmp.ne.s32.totalorder %s101, %s104
      %p110 = scmp.eq.s32.totalorder %s23, 0
      %p111 = por %p109, %p110
      %p112 = scmp.ne.s32.totalorder %s101, %s104
      %p113 = scmp.eq.s32.totalorder %s28, 3
      %p114 = por %p112, %p113
      %p115 = scmp.ne.s32.totalorder %s104, %s105
      %p116 = scmp.eq.s32.totalorder %s28, 0
      %p117 = por %p115, %p116
      %p118 = scmp.ne.s32.totalorder %s104, %s105
      %p119 = scmp.eq.s32.totalorder %s29, 3
      %p120 = por %p118, %p119
      %p122 = scmp.ne.s32.totalorder %s105, %s121
      %p123 = scmp.eq.s32.totalorder %s29, 0
      %p124 = por %p122, %p123
      %s125 = ssub.s32 %s31, %s38
      %s126 = ssub.s32 %s30, %s42
      %s127 = sor.u32 %s125, %s126
      %p128 = scmp.eq.s32.totalorder %s127, 0
      %s130 = sadd.s32 %s129, 1
      %s131 = scalar_select %p128, %s129, %s130
      %p134 = pneg %p128
      %p135 = scmp.eq.s32.totalorder %s23, 3
      %p136 = por %p134, %p135
      %p137 = scmp.ne.s32.totalorder %s129, %s132
      %p138 = scmp.eq.s32.totalorder %s23, 0
      %p139 = por %p137, %p138
      %p140 = scmp.ne.s32.totalorder %s129, %s132
      %p141 = scmp.eq.s32.totalorder %s28, 3
      %p142 = por %p140, %p141
      %p143 = scmp.ne.s32.totalorder %s132, %s133
      %p144 = scmp.eq.s32.totalorder %s28, 0
      %p145 = por %p143, %p144
      %p146 = scmp.ne.s32.totalorder %s132, %s133
      %p147 = scmp.eq.s32.totalorder %s29, 3
      %p148 = por %p146, %p147
      %p150 = scmp.ne.s32.totalorder %s133, %s149
      %p151 = scmp.eq.s32.totalorder %s29, 0
      %p152 = por %p150, %p151
      %s153 = ssub.s32 %s31, %s38
      %s154 = ssub.s32 %s30, %s42
      %s155 = sor.u32 %s153, %s154
      %p156 = scmp.eq.s32.totalorder %s155, 0
      %s158 = sadd.s32 %s157, 1
      %s159 = scalar_select %p156, %s157, %s158
      %p162 = pneg %p156
      %p163 = scmp.eq.s32.totalorder %s23, 3
      %p164 = por %p162, %p163
      %p165 = scmp.ne.s32.totalorder %s157, %s160
      %p166 = scmp.eq.s32.totalorder %s23, 0
      %p167 = por %p165, %p166
      %p168 = scmp.ne.s32.totalorder %s157, %s160
      %p169 = scmp.eq.s32.totalorder %s28, 3
      %p170 = por %p168, %p169
      %p171 = scmp.ne.s32.totalorder %s160, %s161
      %p172 = scmp.eq.s32.totalorder %s28, 0
      %p173 = por %p171, %p172
      %p174 = scmp.ne.s32.totalorder %s160, %s161
      %p175 = scmp.eq.s32.totalorder %s29, 3
      %p176 = por %p174, %p175
      %p178 = scmp.ne.s32.totalorder %s161, %s177
      %p179 = scmp.eq.s32.totalorder %s29, 0
      %p180 = por %p178, %p179
      %p181 = scmp.le.s32.totalorder 1, %s23
      %p182 = scmp.lt.s32.totalorder %s23, 5
      %p183 = pnand %p181, %p182
      %p184 = pneg %p183
      // Predicated region
      $region9: #{tpu_custom_call.1} parent=5 // pred_check
        _
      $region10: #{tpu_custom_call.1} parent=5 // pred_check_branch
        %186 = sbr.rel (%p183) target = $region12
      $region11: #{tpu_custom_call.1} parent=5 // pred_region
        %s187 = ssub.s32 %s23, 1
      $region12: #{tpu_custom_call.1} parent=5 // pred_fallthru
        _
      %p188 = scmp.lt.s32.totalorder %s23, 4
      // Predicated region
      $region13: #{tpu_custom_call.1} parent=5 // pred_check
        %p189 = pneg %p188
      $region14: #{tpu_custom_call.1} parent=5 // pred_check_branch
        %191 = sbr.rel (%p189) target = $region16
      $region15: #{tpu_custom_call.1} parent=5 // pred_region
        // Predicated region
        $region17: #{tpu_custom_call.1} parent=15 // pred_check
          %p192 = pneg %p55
        $region18: #{tpu_custom_call.1} parent=15 // pred_check_branch
          %194 = sbr.rel (%p192) target = $region20
        $region19: #{tpu_custom_call.1} parent=15 // pred_region
          %s195 = sand.u32 %s45, 1
          %s196 = sand.u32 %s45, 1
          %s197 = smul.addr %s196, 16
          %s198 = scalar_lea.vmem [#allocation2], %s197
          %s199 = smul.addr %s30, 8
          %s200 = scalar_lea.vmem %s0, %s199
          // Predicated region
          $region21: #{tpu_custom_call.1} parent=19 // pred_check
            _
          $region22: #{tpu_custom_call.1} parent=19 // pred_check_branch
            %202 = sbr.rel (0) target = $region24
          $region23: #{tpu_custom_call.1} parent=19 // pred_region
            // Predicated region
            $region25: #{tpu_custom_call.1} parent=23 // pred_check
              _
            $region26: #{tpu_custom_call.1} parent=23 // pred_check_branch
              %204 = sbr.rel (0) target = $region28
            $region27: #{tpu_custom_call.1} parent=23 // pred_region
              // Predicated region
              $region40: #{tpu_custom_call.1} parent=27 // pred_check
                _
              $region41: #{tpu_custom_call.1} parent=27 // pred_check_branch
                %222 = sbr.rel (0) target = $region43
              $region42: #{tpu_custom_call.1} parent=27 // pred_region
                loop: start=0, step=1, limit=1
                $region44: #{tpu_custom_call.1} parent=42 // loop_pre_header
                  _
                $region45: #{tpu_custom_call.1} parent=42 // loop_header
                  %s224 = sphi 0, %s228
                  %p225 = scmp.ge.s32.totalorder %s224, 1
                  %s229 = sphi %s200, %s200
                  %s230 = sphi %s198, %s198
                $region46: #{tpu_custom_call.1} parent=42 // loop_header_branch
                  %227 = sbr.rel (%p225) target = $region50
                $region47: #{tpu_custom_call.1} parent=42 // loop_body
                  %v231 = vld [vmem:[%s229] sm:$0xff]
                  %232 = vst [vmem:[%s230] sm:$0xff] %v231
                  %v233 = vld [vmem:[%s229 + $0x10] sm:$0xff]
                  %234 = vst [vmem:[%s230 + $0x8] sm:$0xff] %v233
                $region48: #{tpu_custom_call.1} parent=42 // loop_footer
                  %s228 = sadd.s32 1, %s224
                $region49: #{tpu_custom_call.1} parent=42 // loop_footer_branch
                  %223 = sbr.rel target = $region45
                $region50: #{tpu_custom_call.1} parent=42 // loop_exit
                  _
              $region43: #{tpu_custom_call.1} parent=27 // pred_fallthru
                _
              // Predicated region
              $region51: #{tpu_custom_call.1} parent=27 // pred_check
                _
              $region52: #{tpu_custom_call.1} parent=27 // pred_check_branch
                %236 = sbr.rel target = $region54
              $region53: #{tpu_custom_call.1} parent=27 // pred_region
                _
              $region54: #{tpu_custom_call.1} parent=27 // pred_fallthru
                _
            $region28: #{tpu_custom_call.1} parent=23 // pred_fallthru
              _
            // Predicated region
            $region29: #{tpu_custom_call.1} parent=23 // pred_check
              _
            $region30: #{tpu_custom_call.1} parent=23 // pred_check_branch
              %206 = sbr.rel target = $region32
            $region31: #{tpu_custom_call.1} parent=23 // pred_region
              %s208 = ssub.s32 256, 1
              loop: start=0, step=1, limit=1
              $region33: #{tpu_custom_call.1} parent=31 // loop_pre_header
                _
              $region34: #{tpu_custom_call.1} parent=31 // loop_header
                %s210 = sphi 0, %s214
                %p211 = scmp.ge.s32.totalorder %s210, 1
                %s215 = sphi %s200, %s200
                %s216 = sphi %s198, %s198
              $region35: #{tpu_custom_call.1} parent=31 // loop_header_branch
                %213 = sbr.rel (%p211) target = $region39
              $region36: #{tpu_custom_call.1} parent=31 // loop_body
                %v217 = vld [vmem:[%s215] sm:%s208]
                %218 = vst [vmem:[%s216] sm:%s208] %v217
                %v219 = vld [vmem:[%s215 + $0x10] sm:%s208]
                %220 = vst [vmem:[%s216 + $0x8] sm:%s208] %v219
              $region37: #{tpu_custom_call.1} parent=31 // loop_footer
                %s214 = sadd.s32 1, %s210
              $region38: #{tpu_custom_call.1} parent=31 // loop_footer_branch
                %209 = sbr.rel target = $region34
              $region39: #{tpu_custom_call.1} parent=31 // loop_exit
                _
            $region32: #{tpu_custom_call.1} parent=23 // pred_fallthru
              _
          $region24: #{tpu_custom_call.1} parent=19 // pred_fallthru
            _
          %237 = vnop
        $region20: #{tpu_custom_call.1} parent=15 // pred_fallthru
          _
        // Predicated region
        $region55: #{tpu_custom_call.1} parent=15 // pred_check
          %p238 = pneg %p83
        $region56: #{tpu_custom_call.1} parent=15 // pred_check_branch
          %240 = sbr.rel (%p238) target = $region58
        $region57: #{tpu_custom_call.1} parent=15 // pred_region
          %s241 = sand.u32 %s73, 1
          %s242 = scalar_lea.sflag [#allocation4], %s241
          %s243 = sand.u32 %s73, 1
          %s244 = smul.addr %s243, 32
          %s245 = scalar_lea.vmem [#allocation3], %s244
          %s246 = smul.u32 8, %s30
          %248 = vsyncadd %s242, 0
          %s249 = smul.addr %s31, 16
          %s250 = sadd.s32 %s246, %s249
          %s251 = smul.addr %s250, 4
          %s252 = scalar_lea.hbm %s1, %s251
          %s253 = sshll.u32 %s252, 4
          %s254 = int_to_ptr.hbm [resolvable:$true] %s253
          %s255 = sshll.u32 %s245, 4
          %s256 = int_to_ptr.vmem [resolvable:$true] %s255
          %261 = dma.hbm_to_vmem [thread:$0]  %s254, 512, %s256, %s242, 64, 64, 4
        $region58: #{tpu_custom_call.1} parent=15 // pred_fallthru
          _
        // Predicated region
        $region59: #{tpu_custom_call.1} parent=15 // pred_check
          %p262 = pneg %p111
        $region60: #{tpu_custom_call.1} parent=15 // pred_check_branch
          %264 = sbr.rel (%p262) target = $region62
        $region61: #{tpu_custom_call.1} parent=15 // pred_region
          %s265 = sand.u32 %s101, 1
          %s266 = scalar_lea.sflag [#allocation7], %s265
          %s267 = sand.u32 %s101, 1
          %s268 = smul.addr %s267, 16
          %s269 = scalar_lea.vmem [#allocation6], %s268
          %s270 = smul.u32 8, %s30
          %272 = vsyncadd %s266, 0
          %s273 = smul.addr %s31, 16
          %s274 = sadd.s32 %s270, %s273
          %s275 = smul.addr %s274, 2
          %s276 = scalar_lea.hbm %s2, %s275
          %s277 = sshll.u32 %s276, 4
          %s278 = int_to_ptr.hbm [resolvable:$true] %s277
          %s279 = sshll.u32 %s269, 4
          %s280 = int_to_ptr.vmem [resolvable:$true] %s279
          %285 = dma.hbm_to_vmem [thread:$0]  %s278, 256, %s280, %s266, 32, 32, 2
        $region62: #{tpu_custom_call.1} parent=15 // pred_fallthru
          _
      $region16: #{tpu_custom_call.1} parent=5 // pred_fallthru
        _
      %p286 = scmp.le.s32.totalorder 1, %s23
      %p287 = scmp.lt.s32.totalorder %s23, 5
      %p288 = pnand %p286, %p287
      %p289 = pneg %p288
      // Predicated region
      $region63: #{tpu_custom_call.1} parent=5 // pred_check
        _
      $region64: #{tpu_custom_call.1} parent=5 // pred_check_branch
        %291 = sbr.rel (%p288) target = $region66
      $region65: #{tpu_custom_call.1} parent=5 // pred_region
        %s292 = ssub.s32 %s23, 1
        %s293 = sand.u32 %s48, 1
        %s294 = sand.u32 %s48, 1
        %s295 = smul.addr %s294, 16
        %s296 = scalar_lea.vmem [#allocation2], %s295
        // Predicated region
        $region67: #{tpu_custom_call.1} parent=65 // pred_check
          %p297 = pneg %p61
        $region68: #{tpu_custom_call.1} parent=65 // pred_check_branch
          %299 = sbr.rel (%p297) target = $region70
        $region69: #{tpu_custom_call.1} parent=65 // pred_region
          _
        $region70: #{tpu_custom_call.1} parent=65 // pred_fallthru
          _
        %s300 = sand.u32 %s76, 1
        %s301 = scalar_lea.sflag [#allocation4], %s300
        %s302 = sand.u32 %s76, 1
        %s303 = smul.addr %s302, 32
        %s304 = scalar_lea.vmem [#allocation3], %s303
        // Predicated region
        $region71: #{tpu_custom_call.1} parent=65 // pred_check
          %p305 = pneg %p89
        $region72: #{tpu_custom_call.1} parent=65 // pred_check_branch
          %307 = sbr.rel (%p305) target = $region74
        $region73: #{tpu_custom_call.1} parent=65 // pred_region
          %309 = dma.done %s301, 512
        $region74: #{tpu_custom_call.1} parent=65 // pred_fallthru
          _
        %s310 = sand.u32 %s104, 1
        %s311 = scalar_lea.sflag [#allocation7], %s310
        %s312 = sand.u32 %s104, 1
        %s313 = smul.addr %s312, 16
        %s314 = scalar_lea.vmem [#allocation6], %s313
        // Predicated region
        $region75: #{tpu_custom_call.1} parent=65 // pred_check
          %p315 = pneg %p117
        $region76: #{tpu_custom_call.1} parent=65 // pred_check_branch
          %317 = sbr.rel (%p315) target = $region78
        $region77: #{tpu_custom_call.1} parent=65 // pred_region
          %319 = dma.done %s311, 256
        $region78: #{tpu_custom_call.1} parent=65 // pred_fallthru
          _
        %s320 = sand.u32 %s48, 1
        %s321 = sand.u32 %s48, 1
        %s322 = smul.addr %s321, 16
        %s323 = scalar_lea.vmem [#allocation2], %s322
        %p324 = pneg %p61
        %p325 = pneg %p58
        %s326 = sand.u32 %s76, 1
        %s327 = scalar_lea.sflag [#allocation4], %s326
        %s328 = sand.u32 %s76, 1
        %s329 = smul.addr %s328, 32
        %s330 = scalar_lea.vmem [#allocation3], %s329
        %p331 = pneg %p89
        %p332 = pneg %p86
        %s333 = sand.u32 %s104, 1
        %s334 = scalar_lea.sflag [#allocation7], %s333
        %s335 = sand.u32 %s104, 1
        %s336 = smul.addr %s335, 16
        %s337 = scalar_lea.vmem [#allocation6], %s336
        %p338 = pneg %p117
        %p339 = pneg %p114
        %p340 = pneg %p145
        %p341 = pneg %p142
        %s342 = sand.u32 %s132, 1
        %s343 = scalar_lea.sflag [#allocation5], %s342
        %s344 = sand.u32 %s132, 1
        %s345 = smul.addr %s344, 32
        %s346 = scalar_lea.vmem [#allocation8], %s345
        %p347 = pneg %p173
        %p348 = pneg %p170
        %s349 = sand.u32 %s160, 1
        %s350 = scalar_lea.sflag [#allocation10], %s349
        %s351 = sand.u32 %s160, 1
        %s352 = smul.addr %s351, 16
        %s353 = scalar_lea.vmem [#allocation9], %s352
        %s354 = smul.u32 8, %s32
        %s355 = smul.u32 8, %s32
        %s356 = smul.u32 8, %s32
        %s357 = smul.u32 8, %s32
        %v358 = vld [vmem:[%s296] sm:$0xff]
        %v360 = vrot.slane %v358, 1
        %v361 = vrot.slane %v358, 2
        %v362 = vrot.slane %v358, 3
        %v363 = vrot.slane %v358, 4
        %v364 = vrot.slane %v358, 5
        %v365 = vrot.slane %v358, 6
        %v366 = vrot.slane %v358, 7
        %s367 = scalar_lea.vmem %s296, 8 [#allocation2]
        %v368 = vld [vmem:[%s367] sm:$0xff]
        %v370 = vrot.slane %v368, 1
        %v371 = vrot.slane %v368, 2
        %v372 = vrot.slane %v368, 3
        %v373 = vrot.slane %v368, 4
        %v374 = vrot.slane %v368, 5
        %v375 = vrot.slane %v368, 6
        %v376 = vrot.slane %v368, 7
        %v377 = vld [vmem:[%s304] sm:$0xf]
        %v378 = vld [vmem:[%s304 + $0x4] sm:$0xf]
        %v379 = vld [vmem:[%s304 + $0x8] sm:$0xf]
        %v380 = vld [vmem:[%s304 + $0xc] sm:$0xf]
        %v381 = vld [vmem:[%s304 + $0x10] sm:$0xf]
        %v382 = vld [vmem:[%s304 + $0x14] sm:$0xf]
        %v383 = vld [vmem:[%s304 + $0x18] sm:$0xf]
        %v384 = vld [vmem:[%s304 + $0x1c] sm:$0xf]
        %385 = vrot.lane.b32.xlu0 %v377, 64
        %v386 = vpop.permute.xlu0 %385
        %387 = vrot.lane.b32.xlu0 %v378, 64
        %v388 = vpop.permute.xlu0 %387
        %389 = vrot.lane.b32.xlu0 %v379, 64
        %v390 = vpop.permute.xlu0 %389
        %391 = vrot.lane.b32.xlu0 %v380, 64
        %v392 = vpop.permute.xlu0 %391
        %393 = vrot.lane.b32.xlu0 %v381, 64
        %v394 = vpop.permute.xlu0 %393
        %395 = vrot.lane.b32.xlu0 %v382, 64
        %v396 = vpop.permute.xlu0 %395
        %397 = vrot.lane.b32.xlu0 %v383, 64
        %v398 = vpop.permute.xlu0 %397
        %399 = vrot.lane.b32.xlu0 %v384, 64
        %v400 = vpop.permute.xlu0 %399
        %v401 = vperm.slane %v358, 0
        %v402 = vperm.slane %v360, 0
        %v403 = vperm.slane %v361, 0
        %v404 = vperm.slane %v362, 0
        %v405 = vperm.slane %v363, 0
        %v406 = vperm.slane %v364, 0
        %v407 = vperm.slane %v365, 0
        %v408 = vperm.slane %v366, 0
        %v417 = vmul.f32 %v377, %v401
        %v418 = vmul.f32 %v378, %v402
        %v419 = vmul.f32 %v379, %v403
        %v420 = vmul.f32 %v380, %v404
        %v421 = vmul.f32 %v381, %v405
        %v422 = vmul.f32 %v382, %v406
        %v423 = vmul.f32 %v383, %v407
        %v424 = vmul.f32 %v384, %v408
        %v425 = vperm.slane %v368, 0
        %v426 = vperm.slane %v370, 0
        %v427 = vperm.slane %v371, 0
        %v428 = vperm.slane %v372, 0
        %v429 = vperm.slane %v373, 0
        %v430 = vperm.slane %v374, 0
        %v431 = vperm.slane %v375, 0
        %v432 = vperm.slane %v376, 0
        %v441 = vmul.f32 %v386, %v425
        %v442 = vmul.f32 %v388, %v426
        %v443 = vmul.f32 %v390, %v427
        %v444 = vmul.f32 %v392, %v428
        %v445 = vmul.f32 %v394, %v429
        %v446 = vmul.f32 %v396, %v430
        %v447 = vmul.f32 %v398, %v431
        %v448 = vmul.f32 %v400, %v432
        %v449 = vadd.f32 %v417, %v441
        %v450 = vadd.f32 %v418, %v442
        %v451 = vadd.f32 %v419, %v443
        %v452 = vadd.f32 %v420, %v444
        %v453 = vadd.f32 %v421, %v445
        %v454 = vadd.f32 %v422, %v446
        %v455 = vadd.f32 %v423, %v447
        %v456 = vadd.f32 %v424, %v448
        %457 = vst [vmem:[%s346] sm:$0xf] %v449
        %458 = vst [vmem:[%s346 + $0x4] sm:$0xf] %v450
        %459 = vst [vmem:[%s346 + $0x8] sm:$0xf] %v451
        %460 = vst [vmem:[%s346 + $0xc] sm:$0xf] %v452
        %461 = vst [vmem:[%s346 + $0x10] sm:$0xf] %v453
        %462 = vst [vmem:[%s346 + $0x14] sm:$0xf] %v454
        %463 = vst [vmem:[%s346 + $0x18] sm:$0xf] %v455
        %464 = vst [vmem:[%s346 + $0x1c] sm:$0xf] %v456
        %v465 = vld [vmem:[%s314] sm:$0x3]
        %v466 = vld [vmem:[%s314 + $0x2] sm:$0x3]
        %v467 = vld [vmem:[%s314 + $0x4] sm:$0x3]
        %v468 = vld [vmem:[%s314 + $0x6] sm:$0x3]
        %v469 = vld [vmem:[%s314 + $0x8] sm:$0x3]
        %v470 = vld [vmem:[%s314 + $0xa] sm:$0x3]
        %v471 = vld [vmem:[%s314 + $0xc] sm:$0x3]
        %v472 = vld [vmem:[%s314 + $0xe] sm:$0x3]
        %473 = vrot.lane.b32.xlu0 %v465, 64
        %v474 = vpop.permute.xlu0 %473
        %475 = vrot.lane.b32.xlu0 %v466, 64
        %v476 = vpop.permute.xlu0 %475
        %477 = vrot.lane.b32.xlu0 %v467, 64
        %v478 = vpop.permute.xlu0 %477
        %479 = vrot.lane.b32.xlu0 %v468, 64
        %v480 = vpop.permute.xlu0 %479
        %481 = vrot.lane.b32.xlu0 %v469, 64
        %v482 = vpop.permute.xlu0 %481
        %483 = vrot.lane.b32.xlu0 %v470, 64
        %v484 = vpop.permute.xlu0 %483
        %485 = vrot.lane.b32.xlu0 %v471, 64
        %v486 = vpop.permute.xlu0 %485
        %487 = vrot.lane.b32.xlu0 %v472, 64
        %v488 = vpop.permute.xlu0 %487
        %v489 = vmul.f32 %v465, %v401
        %v490 = vmul.f32 %v466, %v402
        %v491 = vmul.f32 %v467, %v403
        %v492 = vmul.f32 %v468, %v404
        %v493 = vmul.f32 %v469, %v405
        %v494 = vmul.f32 %v470, %v406
        %v495 = vmul.f32 %v471, %v407
        %v496 = vmul.f32 %v472, %v408
        %v497 = vmul.f32 %v474, %v425
        %v498 = vmul.f32 %v476, %v426
        %v499 = vmul.f32 %v478, %v427
        %v500 = vmul.f32 %v480, %v428
        %v501 = vmul.f32 %v482, %v429
        %v502 = vmul.f32 %v484, %v430
        %v503 = vmul.f32 %v486, %v431
        %v504 = vmul.f32 %v488, %v432
        %v505 = vadd.f32 %v489, %v497
        %v506 = vadd.f32 %v490, %v498
        %v507 = vadd.f32 %v491, %v499
        %v508 = vadd.f32 %v492, %v500
        %v509 = vadd.f32 %v493, %v501
        %v510 = vadd.f32 %v494, %v502
        %v511 = vadd.f32 %v495, %v503
        %v512 = vadd.f32 %v496, %v504
        %513 = vst [vmem:[%s353] sm:$0x3] %v505
        %514 = vst [vmem:[%s353 + $0x2] sm:$0x3] %v506
        %515 = vst [vmem:[%s353 + $0x4] sm:$0x3] %v507
        %516 = vst [vmem:[%s353 + $0x6] sm:$0x3] %v508
        %517 = vst [vmem:[%s353 + $0x8] sm:$0x3] %v509
        %518 = vst [vmem:[%s353 + $0xa] sm:$0x3] %v510
        %519 = vst [vmem:[%s353 + $0xc] sm:$0x3] %v511
        %520 = vst [vmem:[%s353 + $0xe] sm:$0x3] %v512
        %s521 = sand.u32 %s132, 1
        %s522 = scalar_lea.sflag [#allocation5], %s521
        %s523 = sand.u32 %s132, 1
        %s524 = smul.addr %s523, 32
        %s525 = scalar_lea.vmem [#allocation8], %s524
        %s526 = sand.u32 %s160, 1
        %s527 = scalar_lea.sflag [#allocation10], %s526
        %s528 = sand.u32 %s160, 1
        %s529 = smul.addr %s528, 16
        %s530 = scalar_lea.vmem [#allocation9], %s529
        // Predicated region
        $region79: #{tpu_custom_call.1} parent=65 // pred_check
          %p531 = pneg %p142
        $region80: #{tpu_custom_call.1} parent=65 // pred_check_branch
          %533 = sbr.rel (%p531) target = $region82
        $region81: #{tpu_custom_call.1} parent=65 // pred_region
          %s534 = smul.u32 8, %s32
          %536 = vsyncadd %s522, 0
          %s537 = smul.addr %s33, 16
          %s538 = sadd.s32 %s534, %s537
          %s539 = smul.addr %s538, 4
          %s540 = scalar_lea.hbm %s3, %s539
          %s541 = sshll.u32 %s525, 4
          %s542 = int_to_ptr.vmem [resolvable:$true] %s541
          %s543 = sshll.u32 %s540, 4
          %s544 = int_to_ptr.hbm [resolvable:$true] %s543
          %549 = dma.vmem_to_hbm [thread:$0]  %s542, 512, %s544, %s522, 64, 64, 4
        $region82: #{tpu_custom_call.1} parent=65 // pred_fallthru
          _
        // Predicated region
        $region83: #{tpu_custom_call.1} parent=65 // pred_check
          %p550 = pneg %p170
        $region84: #{tpu_custom_call.1} parent=65 // pred_check_branch
          %552 = sbr.rel (%p550) target = $region86
        $region85: #{tpu_custom_call.1} parent=65 // pred_region
          %s553 = smul.u32 8, %s32
          %555 = vsyncadd %s527, 0
          %s556 = smul.addr %s33, 16
          %s557 = sadd.s32 %s553, %s556
          %s558 = smul.addr %s557, 2
          %s559 = scalar_lea.hbm %s4, %s558
          %s560 = sshll.u32 %s530, 4
          %s561 = int_to_ptr.vmem [resolvable:$true] %s560
          %s562 = sshll.u32 %s559, 4
          %s563 = int_to_ptr.hbm [resolvable:$true] %s562
          %568 = dma.vmem_to_hbm [thread:$0]  %s561, 256, %s563, %s527, 32, 32, 2
        $region86: #{tpu_custom_call.1} parent=65 // pred_fallthru
          _
      $region66: #{tpu_custom_call.1} parent=5 // pred_fallthru
        _
      %p569 = scmp.le.s32.totalorder 2, %s23
      // Predicated region
      $region87: #{tpu_custom_call.1} parent=5 // pred_check
        %p570 = pneg %p569
      $region88: #{tpu_custom_call.1} parent=5 // pred_check_branch
        %572 = sbr.rel (%p570) target = $region90
      $region89: #{tpu_custom_call.1} parent=5 // pred_region
        %s573 = ssub.s32 %s23, 2
        // Predicated region
        $region91: #{tpu_custom_call.1} parent=89 // pred_check
          %p574 = pneg %p148
        $region92: #{tpu_custom_call.1} parent=89 // pred_check_branch
          %576 = sbr.rel (%p574) target = $region94
        $region93: #{tpu_custom_call.1} parent=89 // pred_region
          %s577 = sand.u32 %s133, 1
          %s578 = scalar_lea.sflag [#allocation5], %s577
          %s579 = sand.u32 %s133, 1
          %s580 = smul.addr %s579, 32
          %s581 = scalar_lea.vmem [#allocation8], %s580
          %583 = dma.done %s578, 512
        $region94: #{tpu_custom_call.1} parent=89 // pred_fallthru
          _
        // Predicated region
        $region95: #{tpu_custom_call.1} parent=89 // pred_check
          %p584 = pneg %p176
        $region96: #{tpu_custom_call.1} parent=89 // pred_check_branch
          %586 = sbr.rel (%p584) target = $region98
        $region97: #{tpu_custom_call.1} parent=89 // pred_region
          %s587 = sand.u32 %s161, 1
          %s588 = scalar_lea.sflag [#allocation10], %s587
          %s589 = sand.u32 %s161, 1
          %s590 = smul.addr %s589, 16
          %s591 = scalar_lea.vmem [#allocation9], %s590
          %593 = dma.done %s588, 256
        $region98: #{tpu_custom_call.1} parent=89 // pred_fallthru
          _
      $region90: #{tpu_custom_call.1} parent=5 // pred_fallthru
        _
    $region6: #{tpu_custom_call.1} parent=1 // loop_footer
      %s27 = sadd.s32 1, %s23
    $region7: #{tpu_custom_call.1} parent=1 // loop_footer_branch
      %22 = sbr.rel target = $region3
    $region8: #{tpu_custom_call.1} parent=1 // loop_exit
      _
    %594 = vsyncpa [#allocation4], 1
    %s595 = scalar_lea.sflag [#allocation4], 1
    %596 = vsyncpa %s595, 1
    %597 = vsyncpa [#allocation7], 1
    %s598 = scalar_lea.sflag [#allocation7], 1
    %599 = vsyncpa %s598, 1
    %600 = vsyncpa [#allocation5], 1
    %s601 = scalar_lea.sflag [#allocation5], 1
    %602 = vsyncpa %s601, 1
    %603 = vsyncpa [#allocation10], 1
    %s604 = scalar_lea.sflag [#allocation10], 1
    %605 = vsyncpa %s604, 1

</llo_original>
